<compile_context>
chip_gen: v5e
topology: v5e:2x2
jax: 0.10.0
libtpu: 0.0.40
codegen_flags: <defaults>
</compile_context>

<pallas_src>
import jax
import jax.numpy as jnp
from jax.experimental import pallas as pl
from jax.experimental.pallas import tpu as pltpu

LN_EPS = 1e-5  # PyTorch nn.LayerNorm / TransformerEncoderLayer default


def _cdiv(a, b):
    return -(-a // b)


def _round_up(n, m):
    return ((n + m - 1) // m) * m


def _layer_norm(h, w, b):
    # PyTorch LayerNorm: biased variance over the last dim.
    mean = jnp.mean(h, axis=-1, keepdims=True)
    var = jnp.mean((h - mean) ** 2, axis=-1, keepdims=True)
    return (h - mean) * jax.lax.rsqrt(var + LN_EPS) * w + b


def transformer_kernel(
    x_ref,       # (tb, D) f32
    wattn_ref,   # (D, D)  folded V->out_proj weight (compute dtype)
    pv_ref,      # (8, D)  f32 packed small params:
                 #   rows: [b_attn, ln1_w, ln1_b, b2, ln2_w, ln2_b, fc_w, fc_b(bcast)]
    w1_t_ref,    # (D, F)  linear1 weight, transposed (compute dtype)
    b1_ref,      # (1, F)  f32
    w2_ref,      # (D, F)  linear2 weight, NOT transposed (contract over F, lane-dense)
    out_ref,     # (tb, 1) f32
):
    x = x_ref[...].astype(jnp.float32)
    cdt = w1_t_ref.dtype  # compute dtype for MXU inputs (bf16 or f32)

    pv = pv_ref[...]                       # single small load, static row slices below
    b_attn = pv[0:1, :]
    ln1w, ln1b = pv[1:2, :], pv[2:3, :]
    b2 = pv[3:4, :]
    ln2w, ln2b = pv[4:5, :], pv[5:6, :]
    wfc = pv[6:7, :]
    bfc = pv[7:8, 0:1]                     # (1, 1) scalar bias

    # --- self-attention with seq_len == 1 (softmax == 1): single folded matmul -----
    attn = jnp.dot(x.astype(cdt), wattn_ref[...],
                   preferred_element_type=jnp.float32) + b_attn

    # --- residual + LayerNorm1 (post-norm, PyTorch default norm_first=False) -------
    h = _layer_norm(x + attn, ln1w, ln1b)

    # --- feed-forward: linear1 -> (+b1, ReLU, cast) fused -> linear2 ----------------
    f = jnp.maximum(
        jnp.dot(h.astype(cdt), w1_t_ref[...],
                preferred_element_type=jnp.float32) + b1_ref[...],
        0.0,
    ).astype(cdt)
    # Contract over F (last dim of BOTH operands -> lane-dense layout for the weight).
    f2 = jax.lax.dot_general(
        f, w2_ref[...],
        dimension_numbers=(((1,), (1,)), ((), ())),
        preferred_element_type=jnp.float32,
    ) + b2

    # --- residual + LayerNorm2 -------------------------------------------------------
    h2 = _layer_norm(h + f2, ln2w, ln2b)

    # --- final fc: Linear(D, 1) as VPU multiply + lane reduction (avoid N=1 matmul) --
    out = jnp.sum(h2 * wfc, axis=-1, keepdims=True) + bfc
    out_ref[...] = out.astype(out_ref.dtype)


def transformer_model_forward(x, params, *, tile_b=512, weight_dtype=jnp.bfloat16):
    """x: (B, D) float32. Returns (B, 1) float32."""
    B, D = x.shape
    F = params["w1"].shape[0]  # dim_feedforward (PyTorch default 2048)

    # ---- Tile selection: large tiles, minimal padding, >=2 grid steps when B >= 16 --
    tile_b = max(8, int(tile_b))
    nt = max(_cdiv(B, tile_b), min(2, _cdiv(B, 8)))   # >=2 tiles for v7x megacore
    tb = _round_up(_cdiv(B, nt), 8)                   # <=7 rows of padding per call
    nt = _cdiv(B, tb)
    Bp = nt * tb
    if Bp != B:
        x = jnp.pad(x, ((0, Bp - B), (0, 0)))

    hi = jax.lax.Precision.HIGHEST

    # ---- glue: fold attention, pack small params, transpose weights ------------------
    wv = params["in_proj_w"][2 * D: 3 * D, :]          # (D, D) V projection
    bv = params["in_proj_b"][2 * D: 3 * D]
    wo = params["out_proj_w"]                          # (D, D)
    bo = params["out_proj_b"]
    # attn = (x @ wv.T + bv) @ wo.T + bo  ==  x @ (wv.T @ wo.T) + (bv @ wo.T + bo)
    w_attn = jnp.dot(wv.T, wo.T, precision=hi).astype(weight_dtype)        # (D, D)
    b_attn = jnp.dot(bv, wo.T, precision=hi) + bo                          # (D,)

    # One (8, D) f32 array for all the tiny per-feature params (single DMA channel).
    pv = jnp.stack(
        [
            b_attn,
            params["ln1_w"], params["ln1_b"],
            params["b2"],
            params["ln2_w"], params["ln2_b"],
            params["fc_w"].reshape(D),
            jnp.broadcast_to(params["fc_b"].reshape(1), (D,)),
        ],
        axis=0,
    ).astype(jnp.float32)                                                   # (8, D)

    w1_t = params["w1"].T.astype(weight_dtype)                              # (D, F)
    b1 = params["b1"].reshape(1, F).astype(jnp.float32)
    w2 = params["w2"].astype(weight_dtype)                                  # (D, F)

    def full_spec(shape):
        nd = len(shape)
        return pl.BlockSpec(shape, lambda i: (0,) * nd)

    # VMEM budget: (tb, F) f32 FFN intermediate (+bf16 copy), x/out double buffers,
    # double-buffered weights, headroom.  Clamp to [32 MiB, 64 MiB] (v5e default is 16 MiB;
    # v7x physical is 64 MiB).
    w_bytes = jnp.dtype(weight_dtype).itemsize
    vmem_est = tb * F * 8 + tb * D * 48 + 4 * D * F * w_bytes + (4 << 20)
    vmem_limit = int(min(64 << 20, max(32 << 20, vmem_est)))

    out = pl.pallas_call(
        transformer_kernel,
        out_shape=jax.ShapeDtypeStruct((Bp, 1), jnp.float32),
        grid_spec=pltpu.PrefetchScalarGridSpec(
            num_scalar_prefetch=0,
            grid=(nt,),
            in_specs=[
                pl.BlockSpec((tb, D), lambda i: (i, 0)),   # x (batch-tiled)
                full_spec((D, D)),                         # w_attn   (grid-invariant)
                full_spec((8, D)),                         # packed small params
                full_spec((D, F)),                         # w1^T
                full_spec((1, F)),                         # b1
                full_spec((D, F)),                         # w2 (contract over F)
            ],
            out_specs=pl.BlockSpec((tb, 1), lambda i: (i, 0)),
        ),
        compiler_params=pltpu.CompilerParams(
            dimension_semantics=("parallel",),
            vmem_limit_bytes=vmem_limit,
        ),
    )(x, w_attn, pv, w1_t, b1, w2)

    return out[:B]


def make_params(key, input_dim, dim_feedforward=2048):
    """Deterministic synthetic parameters matching nn.TransformerEncoderLayer + Linear."""
    D, F = input_dim, dim_feedforward
    ks = jax.random.split(key, 8)
    n = lambda k, shape, s=0.05: (s * jax.random.normal(k, shape)).astype(jnp.float32)
    return {
        "in_proj_w": n(ks[0], (3 * D, D)),     # MultiheadAttention in_proj_weight
        "in_proj_b": n(ks[1], (3 * D,)),
        "out_proj_w": n(ks[2], (D, D)),
        "out_proj_b": n(ks[3], (D,)),
        "ln1_w": jnp.ones((D,), jnp.float32),
        "ln1_b": jnp.zeros((D,), jnp.float32),
        "w1": n(ks[4], (F, D)),                # linear1
        "b1": n(ks[5], (F,)),
        "w2": n(ks[6], (D, F)),                # linear2
        "b2": jnp.zeros((D,), jnp.float32),
        "ln2_w": jnp.ones((D,), jnp.float32),
        "ln2_b": jnp.zeros((D,), jnp.float32),
        "fc_w": n(ks[7], (1, D)),              # fc = Linear(D, 1)
        "fc_b": jnp.zeros((1,), jnp.float32),
    }


def reference_forward(x, params):
    """Pure-JAX reference (eval-mode PyTorch semantics, seq_len=1), full f32 precision."""
    hi = jax.lax.Precision.HIGHEST
    D = x.shape[1]
    wv = params["in_proj_w"][2 * D: 3 * D]
    bv = params["in_proj_b"][2 * D: 3 * D]
    v = jnp.dot(x, wv.T, precision=hi) + bv
    attn = jnp.dot(v, params["out_proj_w"].T, precision=hi) + params["out_proj_b"]

    def ln(h, w, b):
        m = h.mean(-1, keepdims=True)
        var = ((h - m) ** 2).mean(-1, keepdims=True)
        return (h - m) / jnp.sqrt(var + LN_EPS) * w + b

    h = ln(x + attn, params["ln1_w"], params["ln1_b"])
    f = jnp.maximum(jnp.dot(h, params["w1"].T, precision=hi) + params["b1"], 0.0)
    f = jnp.dot(f, params["w2"].T, precision=hi) + params["b2"]
    h2 = ln(h + f, params["ln2_w"], params["ln2_b"])
    return jnp.dot(h2, params["fc_w"].T, precision=hi) + params["fc_b"]


if __name__ == "__main__":
    # input_dim=32  ->  PyTorch picks nhead=8 (irrelevant to the math: seq_len=1).
    B, D = 8, 32
    key = jax.random.PRNGKey(0)
    k_x, k_p, k_x2, k_x3 = jax.random.split(key, 4)
    x = jax.random.normal(k_x, (B, D), dtype=jnp.float32)
    params = make_params(k_p, D)
    ref = reference_forward(x, params)

    # 1) f32-weight path: structurally exact (folded attention, fused layer).
    out_f32 = jax.block_until_ready(
        transformer_model_forward(x, params, weight_dtype=jnp.float32))
    assert out_f32.shape == (B, 1), out_f32.shape
    err_f32 = float(jnp.max(jnp.abs(out_f32 - ref)))
    assert err_f32 < 5e-4, f"f32 mismatch: max abs err {err_f32}"

    # 2) bf16-weight fast path (f32 accumulation / f32 residual + LayerNorm).
    out_bf16 = jax.block_until_ready(
        transformer_model_forward(x, params, weight_dtype=jnp.bfloat16))
    err_bf16 = float(jnp.max(jnp.abs(out_bf16 - ref)))
    assert err_bf16 < 2e-2, f"bf16 mismatch: max abs err {err_bf16}"

    # 3) Non-divisible batch: exercises minimal zero-padding + forced 2-step grid.
    x2 = jax.random.normal(k_x2, (10, D), dtype=jnp.float32)
    ref2 = reference_forward(x2, params)
    out2 = jax.block_until_ready(
        transformer_model_forward(x2, params, weight_dtype=jnp.float32))
    assert out2.shape == (10, 1), out2.shape
    err2 = float(jnp.max(jnp.abs(out2 - ref2)))
    assert err2 < 5e-4, f"padded-batch mismatch: max abs err {err2}"

    # 4) Multi-tile grid (tile derived from B, grid=(3,)): resident weights across steps.
    x3 = jax.random.normal(k_x3, (48, D), dtype=jnp.float32)
    ref3 = reference_forward(x3, params)
    out3 = jax.block_until_ready(
        transformer_model_forward(x3, params, tile_b=16, weight_dtype=jnp.float32))
    assert out3.shape == (48, 1), out3.shape
    err3 = float(jnp.max(jnp.abs(out3 - ref3)))
    assert err3 < 5e-4, f"multi-tile mismatch: max abs err {err3}"

    print("KERNEL_OK")
</pallas_src>

<mosaic_0001>
module attributes {stable_mosaic.version = 11 : i64} {
  func.func @transformer_kernel(%arg0: i32, %arg1: memref<8x32xf32, #tpu.memory_space<vmem>>, %arg2: memref<32x32xf32, #tpu.memory_space<vmem>>, %arg3: memref<8x32xf32, #tpu.memory_space<vmem>>, %arg4: memref<32x2048xf32, #tpu.memory_space<vmem>>, %arg5: memref<1x2048xf32, #tpu.memory_space<vmem>>, %arg6: memref<32x2048xf32, #tpu.memory_space<vmem>>, %arg7: memref<8x1xf32, #tpu.memory_space<vmem>>) attributes {dimension_semantics = [#tpu.dimension_semantics<parallel>], iteration_bounds = array<i64: 1>, scalar_prefetch = 0 : i64, scratch_operands = 0 : i64, tpu.core_type = #tpu.core_type<tc>, window_params = [{transform_indices = @transform_0, window_bounds = array<i64: 8, 32>}, {pipeline_mode = #tpu.pipeline_mode<synchronous>, transform_indices = @transform_1, window_bounds = array<i64: 32, 32>}, {pipeline_mode = #tpu.pipeline_mode<synchronous>, transform_indices = @transform_2, window_bounds = array<i64: 8, 32>}, {pipeline_mode = #tpu.pipeline_mode<synchronous>, transform_indices = @transform_3, window_bounds = array<i64: 32, 2048>}, {pipeline_mode = #tpu.pipeline_mode<synchronous>, transform_indices = @transform_4, window_bounds = array<i64: 1, 2048>}, {pipeline_mode = #tpu.pipeline_mode<synchronous>, transform_indices = @transform_5, window_bounds = array<i64: 32, 2048>}, {transform_indices = @transform_6, window_bounds = array<i64: 8, 1>}]} {
    %c0 = arith.constant 0 : index
    %c0_0 = arith.constant 0 : index
    %0 = vector.load %arg1[%c0, %c0_0] : memref<8x32xf32, #tpu.memory_space<vmem>>, vector<8x32xf32>
    %c0_1 = arith.constant 0 : index
    %c0_2 = arith.constant 0 : index
    %1 = vector.load %arg3[%c0_1, %c0_2] : memref<8x32xf32, #tpu.memory_space<vmem>>, vector<8x32xf32>
    %2 = vector.extract_strided_slice %1 {offsets = [0, 0], sizes = [1, 32], strides = [1, 1]} : vector<8x32xf32> to vector<1x32xf32>
    %3 = vector.extract_strided_slice %1 {offsets = [1, 0], sizes = [1, 32], strides = [1, 1]} : vector<8x32xf32> to vector<1x32xf32>
    %4 = vector.extract_strided_slice %1 {offsets = [2, 0], sizes = [1, 32], strides = [1, 1]} : vector<8x32xf32> to vector<1x32xf32>
    %5 = vector.extract_strided_slice %1 {offsets = [3, 0], sizes = [1, 32], strides = [1, 1]} : vector<8x32xf32> to vector<1x32xf32>
    %6 = vector.extract_strided_slice %1 {offsets = [4, 0], sizes = [1, 32], strides = [1, 1]} : vector<8x32xf32> to vector<1x32xf32>
    %7 = vector.extract_strided_slice %1 {offsets = [5, 0], sizes = [1, 32], strides = [1, 1]} : vector<8x32xf32> to vector<1x32xf32>
    %8 = vector.extract_strided_slice %1 {offsets = [6, 0], sizes = [1, 32], strides = [1, 1]} : vector<8x32xf32> to vector<1x32xf32>
    %9 = vector.extract_strided_slice %1 {offsets = [7, 0], sizes = [1, 1], strides = [1, 1]} : vector<8x32xf32> to vector<1x1xf32>
    %c0_3 = arith.constant 0 : index
    %c0_4 = arith.constant 0 : index
    %10 = vector.load %arg2[%c0_3, %c0_4] : memref<32x32xf32, #tpu.memory_space<vmem>>, vector<32x32xf32>
    %cst = arith.constant dense<0.000000e+00> : vector<8x32xf32>
    %11 = tpu.matmul %0, %10, %cst {dimension_numbers = #tpu.dot_dimension_numbers<[1], [0], [0], [1], [0, 0, 1, 1], [], []>} : vector<8x32xf32>, vector<32x32xf32>, vector<8x32xf32> -> vector<8x32xf32>
    %12 = vector.broadcast %2 : vector<1x32xf32> to vector<8x32xf32>
    %13 = arith.addf %11, %12 : vector<8x32xf32>
    %14 = arith.addf %0, %13 : vector<8x32xf32>
    %cst_5 = arith.constant dense<0.000000e+00> : vector<8xf32>
    %15 = vector.multi_reduction <add>, %14, %cst_5 [1] : vector<8x32xf32> to vector<8xf32>
    %16 = vector.shape_cast %15 : vector<8xf32> to vector<8x1xf32>
    %cst_6 = arith.constant 3.200000e+01 : f32
    %17 = vector.broadcast %cst_6 : f32 to vector<8x1xf32>
    %18 = arith.divf %16, %17 : vector<8x1xf32>
    %19 = vector.broadcast %18 : vector<8x1xf32> to vector<8x32xf32>
    %20 = arith.subf %14, %19 : vector<8x32xf32>
    %21 = arith.mulf %20, %20 : vector<8x32xf32>
    %cst_7 = arith.constant dense<0.000000e+00> : vector<8xf32>
    %22 = vector.multi_reduction <add>, %21, %cst_7 [1] : vector<8x32xf32> to vector<8xf32>
    %23 = vector.shape_cast %22 : vector<8xf32> to vector<8x1xf32>
    %cst_8 = arith.constant 3.200000e+01 : f32
    %24 = vector.broadcast %cst_8 : f32 to vector<8x1xf32>
    %25 = arith.divf %23, %24 : vector<8x1xf32>
    %26 = vector.broadcast %18 : vector<8x1xf32> to vector<8x32xf32>
    %27 = arith.subf %14, %26 : vector<8x32xf32>
    %cst_9 = arith.constant 9.99999974E-6 : f32
    %28 = vector.broadcast %cst_9 : f32 to vector<8x1xf32>
    %29 = arith.addf %25, %28 : vector<8x1xf32>
    %30 = math.rsqrt %29 : vector<8x1xf32>
    %31 = vector.broadcast %30 : vector<8x1xf32> to vector<8x32xf32>
    %32 = arith.mulf %27, %31 : vector<8x32xf32>
    %33 = vector.broadcast %3 : vector<1x32xf32> to vector<8x32xf32>
    %34 = arith.mulf %32, %33 : vector<8x32xf32>
    %35 = vector.broadcast %4 : vector<1x32xf32> to vector<8x32xf32>
    %36 = arith.addf %34, %35 : vector<8x32xf32>
    %c0_10 = arith.constant 0 : index
    %c0_11 = arith.constant 0 : index
    %37 = vector.load %arg4[%c0_10, %c0_11] : memref<32x2048xf32, #tpu.memory_space<vmem>>, vector<32x2048xf32>
    %cst_12 = arith.constant dense<0.000000e+00> : vector<8x2048xf32>
    %38 = tpu.matmul %36, %37, %cst_12 {dimension_numbers = #tpu.dot_dimension_numbers<[1], [0], [0], [1], [0, 0, 1, 1], [], []>} : vector<8x32xf32>, vector<32x2048xf32>, vector<8x2048xf32> -> vector<8x2048xf32>
    %c0_13 = arith.constant 0 : index
    %c0_14 = arith.constant 0 : index
    %39 = vector.load %arg5[%c0_13, %c0_14] : memref<1x2048xf32, #tpu.memory_space<vmem>>, vector<1x2048xf32>
    %40 = vector.broadcast %39 : vector<1x2048xf32> to vector<8x2048xf32>
    %41 = arith.addf %38, %40 : vector<8x2048xf32>
    %cst_15 = arith.constant 0.000000e+00 : f32
    %42 = vector.broadcast %cst_15 : f32 to vector<8x2048xf32>
    %43 = arith.maximumf %41, %42 : vector<8x2048xf32>
    %c0_16 = arith.constant 0 : index
    %c0_17 = arith.constant 0 : index
    %44 = vector.load %arg6[%c0_16, %c0_17] : memref<32x2048xf32, #tpu.memory_space<vmem>>, vector<32x2048xf32>
    %cst_18 = arith.constant dense<0.000000e+00> : vector<8x32xf32>
    %45 = tpu.matmul %43, %44, %cst_18 {dimension_numbers = #tpu.dot_dimension_numbers<[1], [1], [0], [0], [0, 0, 1, 0], [], []>} : vector<8x2048xf32>, vector<32x2048xf32>, vector<8x32xf32> -> vector<8x32xf32>
    %46 = vector.broadcast %5 : vector<1x32xf32> to vector<8x32xf32>
    %47 = arith.addf %45, %46 : vector<8x32xf32>
    %48 = arith.addf %36, %47 : vector<8x32xf32>
    %cst_19 = arith.constant dense<0.000000e+00> : vector<8xf32>
    %49 = vector.multi_reduction <add>, %48, %cst_19 [1] : vector<8x32xf32> to vector<8xf32>
    %50 = vector.shape_cast %49 : vector<8xf32> to vector<8x1xf32>
    %cst_20 = arith.constant 3.200000e+01 : f32
    %51 = vector.broadcast %cst_20 : f32 to vector<8x1xf32>
    %52 = arith.divf %50, %51 : vector<8x1xf32>
    %53 = vector.broadcast %52 : vector<8x1xf32> to vector<8x32xf32>
    %54 = arith.subf %48, %53 : vector<8x32xf32>
    %55 = arith.mulf %54, %54 : vector<8x32xf32>
    %cst_21 = arith.constant dense<0.000000e+00> : vector<8xf32>
    %56 = vector.multi_reduction <add>, %55, %cst_21 [1] : vector<8x32xf32> to vector<8xf32>
    %57 = vector.shape_cast %56 : vector<8xf32> to vector<8x1xf32>
    %cst_22 = arith.constant 3.200000e+01 : f32
    %58 = vector.broadcast %cst_22 : f32 to vector<8x1xf32>
    %59 = arith.divf %57, %58 : vector<8x1xf32>
    %60 = vector.broadcast %52 : vector<8x1xf32> to vector<8x32xf32>
    %61 = arith.subf %48, %60 : vector<8x32xf32>
    %cst_23 = arith.constant 9.99999974E-6 : f32
    %62 = vector.broadcast %cst_23 : f32 to vector<8x1xf32>
    %63 = arith.addf %59, %62 : vector<8x1xf32>
    %64 = math.rsqrt %63 : vector<8x1xf32>
    %65 = vector.broadcast %64 : vector<8x1xf32> to vector<8x32xf32>
    %66 = arith.mulf %61, %65 : vector<8x32xf32>
    %67 = vector.broadcast %6 : vector<1x32xf32> to vector<8x32xf32>
    %68 = arith.mulf %66, %67 : vector<8x32xf32>
    %69 = vector.broadcast %7 : vector<1x32xf32> to vector<8x32xf32>
    %70 = arith.addf %68, %69 : vector<8x32xf32>
    %71 = vector.broadcast %8 : vector<1x32xf32> to vector<8x32xf32>
    %72 = arith.mulf %70, %71 : vector<8x32xf32>
    %cst_24 = arith.constant dense<0.000000e+00> : vector<8xf32>
    %73 = vector.multi_reduction <add>, %72, %cst_24 [1] : vector<8x32xf32> to vector<8xf32>
    %74 = vector.shape_cast %73 : vector<8xf32> to vector<8x1xf32>
    %75 = vector.broadcast %9 : vector<1x1xf32> to vector<8x1xf32>
    %76 = arith.addf %74, %75 : vector<8x1xf32>
    %c0_25 = arith.constant 0 : index
    %c0_26 = arith.constant 0 : index
    %77 = vector.load %arg7[%c0_25, %c0_26] : memref<8x1xf32, #tpu.memory_space<vmem>>, vector<8x1xf32>
    tpu.vector_store %arg7[%c0_25, %c0_26], %76 {strides = array<i32>} : memref<8x1xf32, #tpu.memory_space<vmem>>, vector<8x1xf32>,
    return
  }
  func.func @transform_0(%arg0: i32) -> (i32, i32) {
    %c0_i32 = arith.constant 0 : i32
    %c0_i32_0 = arith.constant 0 : i32
    return %arg0, %c0_i32 : i32, i32
  }
  func.func @transform_1(%arg0: i32) -> (i32, i32) {
    %c0_i32 = arith.constant 0 : i32
    %c0_i32_0 = arith.constant 0 : i32
    %c0_i32_1 = arith.constant 0 : i32
    return %c0_i32, %c0_i32_0 : i32, i32
  }
  func.func @transform_2(%arg0: i32) -> (i32, i32) {
    %c0_i32 = arith.constant 0 : i32
    %c0_i32_0 = arith.constant 0 : i32
    %c0_i32_1 = arith.constant 0 : i32
    return %c0_i32, %c0_i32_0 : i32, i32
  }
  func.func @transform_3(%arg0: i32) -> (i32, i32) {
    %c0_i32 = arith.constant 0 : i32
    %c0_i32_0 = arith.constant 0 : i32
    %c0_i32_1 = arith.constant 0 : i32
    return %c0_i32, %c0_i32_0 : i32, i32
  }
  func.func @transform_4(%arg0: i32) -> (i32, i32) {
    %c0_i32 = arith.constant 0 : i32
    %c0_i32_0 = arith.constant 0 : i32
    %c0_i32_1 = arith.constant 0 : i32
    return %c0_i32, %c0_i32_0 : i32, i32
  }
  func.func @transform_5(%arg0: i32) -> (i32, i32) {
    %c0_i32 = arith.constant 0 : i32
    %c0_i32_0 = arith.constant 0 : i32
    %c0_i32_1 = arith.constant 0 : i32
    return %c0_i32, %c0_i32_0 : i32, i32
  }
  func.func @transform_6(%arg0: i32) -> (i32, i32) {
    %c0_i32 = arith.constant 0 : i32
    %c0_i32_0 = arith.constant 0 : i32
    return %arg0, %c0_i32 : i32, i32
  }
}

</mosaic_0001>

<llo_original>
// kernel: tpu_custom_call.1
$region0: #{tpu_custom_call.1}
  #allocation0 [shape = 'u32[]', space=smem, size = 0x4, offset = 0x4, fixed_abs, tag = 'smem constant byte address 0x4 - core index']
  #allocation1 [shape = 'u32[72,128]{1,0:T(1,128)}', space=vmem, size = 0x9000, scoped, tag = 'internal scratch']
  %s0 = inlined_call_operand.hbm [shape: f32[8,32], index: 0, kind: input, shape index: {}]
  %s1 = inlined_call_operand.hbm [shape: f32[32,32], index: 1, kind: input, shape index: {}]
  %s2 = inlined_call_operand.hbm [shape: f32[8,32], index: 2, kind: input, shape index: {}]
  %s3 = inlined_call_operand.hbm [shape: f32[32,2048], index: 3, kind: input, shape index: {}]
  %s4 = inlined_call_operand.hbm [shape: f32[1,2048], index: 4, kind: input, shape index: {}]
  %s5 = inlined_call_operand.hbm [shape: f32[32,2048], index: 5, kind: input, shape index: {}]
  %s6 = inlined_call_operand.vmem [shape: f32[8,1], index: 6, kind: output, shape index: {}]
  %s7 = sld [smem:[#allocation0]]
  $region58: #{tpu_custom_call.1} parent=0
    _
  %s9 = ssub.s32 1, %s7
  %s10 = scalar_select 0, %s9, %s7
  $region1: #{tpu_custom_call.1} parent=0
    #allocation2 [shape = 'u8[4096]{0}', space=vmem, size = 0x1000, scoped, tag = 'input window, operand 0, single buffered']
    #allocation3 [shape = 's32[1]{0}', space=sflag, size = 0x4, scoped, tag = 'scoped memory for tpu_custom_call.1']
    #allocation4 [shape = 'u8[16384]{0}', space=vmem, size = 0x4000, scoped, tag = 'input window, operand 1, single buffered']
    #allocation5 [shape = 's32[1]{0}', space=sflag, size = 0x4, scoped, tag = 'scoped memory for tpu_custom_call.1']
    #allocation6 [shape = 'u8[4096]{0}', space=vmem, size = 0x1000, scoped, tag = 'input window, operand 2, single buffered']
    #allocation7 [shape = 'u8[262144]{0}', space=vmem, size = 0x40000, scoped, tag = 'input window, operand 3, single buffered']
    #allocation8 [shape = 's32[1]{0}', space=sflag, size = 0x4, scoped, tag = 'scoped memory for tpu_custom_call.1']
    #allocation9 [shape = 'u8[8192]{0}', space=vmem, size = 0x2000, scoped, tag = 'input window, operand 4, single buffered']
    #allocation10 [shape = 'u8[262144]{0}', space=vmem, size = 0x40000, scoped, tag = 'input window, operand 5, single buffered']
    #allocation11 [shape = 's32[1]{0}', space=sflag, size = 0x4, scoped, tag = 'scoped memory for tpu_custom_call.1']
    %11 = vsyncpa [#allocation3], 0
    %12 = vsyncpa [#allocation5], 0
    %13 = vsyncpa [#allocation8], 0
    %14 = vsyncpa [#allocation11], 0
    // Predicated region
    $region2: #{tpu_custom_call.1} parent=1 // pred_check
      _
    $region3: #{tpu_custom_call.1} parent=1 // pred_check_branch
      %16 = sbr.rel (0) target = $region5
    $region4: #{tpu_custom_call.1} parent=1 // pred_region
      %18 = vsyncadd [#allocation3], 0
      %s20 = sshll.u32 %s0, 4
      %s21 = int_to_ptr.hbm [resolvable:$true] %s20
      %s22 = sshll.u32 [#allocation2], 4
      %s23 = int_to_ptr.vmem [resolvable:$true] %s22
      %25 = dma.hbm_to_vmem [thread:$0]  %s21, 128, %s23, [#allocation3]
    $region5: #{tpu_custom_call.1} parent=1 // pred_fallthru
      _
    // Predicated region
    $region6: #{tpu_custom_call.1} parent=1 // pred_check
      _
    $region7: #{tpu_custom_call.1} parent=1 // pred_check_branch
      %27 = sbr.rel (0) target = $region9
    $region8: #{tpu_custom_call.1} parent=1 // pred_region
      %29 = vsyncadd [#allocation5], 0
      %s30 = sshll.u32 %s1, 4
      %s31 = int_to_ptr.hbm [resolvable:$true] %s30
      %s32 = sshll.u32 [#allocation4], 4
      %s33 = int_to_ptr.vmem [resolvable:$true] %s32
      %38 = dma.hbm_to_vmem [thread:$0]  %s31, 512, %s33, [#allocation5], 128, 128, 8
    $region9: #{tpu_custom_call.1} parent=1 // pred_fallthru
      _
    // Predicated region
    $region10: #{tpu_custom_call.1} parent=1 // pred_check
      _
    $region11: #{tpu_custom_call.1} parent=1 // pred_check_branch
      %40 = sbr.rel (0) target = $region13
    $region12: #{tpu_custom_call.1} parent=1 // pred_region
      %42 = vsyncadd [#allocation5], 0
      %s44 = sshll.u32 %s2, 4
      %s45 = int_to_ptr.hbm [resolvable:$true] %s44
      %s46 = sshll.u32 [#allocation6], 4
      %s47 = int_to_ptr.vmem [resolvable:$true] %s46
      %49 = dma.hbm_to_vmem [thread:$0]  %s45, 128, %s47, [#allocation5]
    $region13: #{tpu_custom_call.1} parent=1 // pred_fallthru
      _
    // Predicated region
    $region14: #{tpu_custom_call.1} parent=1 // pred_check
      _
    $region15: #{tpu_custom_call.1} parent=1 // pred_check_branch
      %51 = sbr.rel (0) target = $region17
    $region16: #{tpu_custom_call.1} parent=1 // pred_region
      %53 = vsyncadd [#allocation8], 0
      %s54 = sshll.u32 %s3, 4
      %s55 = int_to_ptr.hbm [resolvable:$true] %s54
      %s56 = sshll.u32 [#allocation7], 4
      %s57 = int_to_ptr.vmem [resolvable:$true] %s56
      %62 = dma.hbm_to_vmem [thread:$0]  %s55, 8192, %s57, [#allocation8], 2048, 2048, 128
    $region17: #{tpu_custom_call.1} parent=1 // pred_fallthru
      _
    // Predicated region
    $region18: #{tpu_custom_call.1} parent=1 // pred_check
      _
    $region19: #{tpu_custom_call.1} parent=1 // pred_check_branch
      %64 = sbr.rel (0) target = $region21
    $region20: #{tpu_custom_call.1} parent=1 // pred_region
      %66 = vsyncadd [#allocation8], 0
      %s68 = sshll.u32 %s4, 4
      %s69 = int_to_ptr.hbm [resolvable:$true] %s68
      %s70 = sshll.u32 [#allocation9], 4
      %s71 = int_to_ptr.vmem [resolvable:$true] %s70
      %73 = dma.hbm_to_vmem [thread:$0]  %s69, 256, %s71, [#allocation8]
    $region21: #{tpu_custom_call.1} parent=1 // pred_fallthru
      _
    // Predicated region
    $region22: #{tpu_custom_call.1} parent=1 // pred_check
      _
    $region23: #{tpu_custom_call.1} parent=1 // pred_check_branch
      %75 = sbr.rel (0) target = $region25
    $region24: #{tpu_custom_call.1} parent=1 // pred_region
      %77 = vsyncadd [#allocation11], 0
      %s78 = sshll.u32 %s5, 4
      %s79 = int_to_ptr.hbm [resolvable:$true] %s78
      %s80 = sshll.u32 [#allocation10], 4
      %s81 = int_to_ptr.vmem [resolvable:$true] %s80
      %86 = dma.hbm_to_vmem [thread:$0]  %s79, 8192, %s81, [#allocation11], 2048, 2048, 128
    $region25: #{tpu_custom_call.1} parent=1 // pred_fallthru
      _
    // Predicated region
    $region26: #{tpu_custom_call.1} parent=1 // pred_check
      _
    $region27: #{tpu_custom_call.1} parent=1 // pred_check_branch
      %88 = sbr.rel (0) target = $region29
    $region28: #{tpu_custom_call.1} parent=1 // pred_region
      %90 = dma.done [#allocation3], 128
    $region29: #{tpu_custom_call.1} parent=1 // pred_fallthru
      _
    // Predicated region
    $region30: #{tpu_custom_call.1} parent=1 // pred_check
      _
    $region31: #{tpu_custom_call.1} parent=1 // pred_check_branch
      %92 = sbr.rel (0) target = $region33
    $region32: #{tpu_custom_call.1} parent=1 // pred_region
      %94 = dma.done [#allocation5], 512
    $region33: #{tpu_custom_call.1} parent=1 // pred_fallthru
      _
    // Predicated region
    $region34: #{tpu_custom_call.1} parent=1 // pred_check
      _
    $region35: #{tpu_custom_call.1} parent=1 // pred_check_branch
      %96 = sbr.rel (0) target = $region37
    $region36: #{tpu_custom_call.1} parent=1 // pred_region
      %98 = dma.done [#allocation5], 128
    $region37: #{tpu_custom_call.1} parent=1 // pred_fallthru
      _
    // Predicated region
    $region38: #{tpu_custom_call.1} parent=1 // pred_check
      _
    $region39: #{tpu_custom_call.1} parent=1 // pred_check_branch
      %100 = sbr.rel (0) target = $region41
    $region40: #{tpu_custom_call.1} parent=1 // pred_region
      %102 = dma.done [#allocation8], 8192
    $region41: #{tpu_custom_call.1} parent=1 // pred_fallthru
      _
    // Predicated region
    $region42: #{tpu_custom_call.1} parent=1 // pred_check
      _
    $region43: #{tpu_custom_call.1} parent=1 // pred_check_branch
      %104 = sbr.rel (0) target = $region45
    $region44: #{tpu_custom_call.1} parent=1 // pred_region
      %106 = dma.done [#allocation8], 256
    $region45: #{tpu_custom_call.1} parent=1 // pred_fallthru
      _
    // Predicated region
    $region46: #{tpu_custom_call.1} parent=1 // pred_check
      _
    $region47: #{tpu_custom_call.1} parent=1 // pred_check_branch
      %108 = sbr.rel (0) target = $region49
    $region48: #{tpu_custom_call.1} parent=1 // pred_region
      %110 = dma.done [#allocation11], 8192
    $region49: #{tpu_custom_call.1} parent=1 // pred_fallthru
      _
    %v111 = vld [vmem:[#allocation2] sm:$0xff]
    %v112 = vld [vmem:[#allocation6] sm:$0xff]
    %v113 = vld [vmem:[#allocation4] sm:$0xff]
    %v114 = vld [vmem:[#allocation4 + $0x8] sm:$0xff]
    %v115 = vld [vmem:[#allocation4 + $0x10] sm:$0xff]
    %v116 = vld [vmem:[#allocation4 + $0x18] sm:$0xff]
    %v117 = vperm.slane %v112, 0
    %vm118 = vcmask 261120
    %v120 = vsel %vm118, %v111, 0
    %122 = vmatpush.msra.mxu0 0.0
    %123 = vmatpush.msra.mxu0 0.0
    %124 = vmatpush.msra.mxu0 0.0
    %125 = vmatpush.msra.mxu0 0.0
    %126 = vmatpush.msra.mxu0 0.0
    %127 = vmatpush.msra.mxu0 0.0
    %128 = vmatpush.msra.mxu0 0.0
    %129 = vmatpush.msra.mxu0 0.0
    %130 = vmatpush.msra.mxu0 0.0
    %131 = vmatpush.msra.mxu0 0.0
    %132 = vmatpush.msra.mxu0 0.0
    %133 = vmatpush.msra.mxu0 0.0
    %134 = vmatpush.msra.mxu0 %v116
    %135 = vmatpush.msra.mxu0 %v115
    %136 = vmatpush.msra.mxu0 %v114
    %137 = vmatpush.msra.mxu0 %v113
    %138 = vmatmul.f32.gmra.mxu0 %v120
    %v139 = vpop.f32.mrf.mxu0
    %v140 = vadd.f32 %v117, %v139
    %141 = vdwg.mxu0
    %v142 = vadd.f32 %v111, %v140
    %v143 = vsel %vm118, %v142, 0.0
    %144 = vadd.xlane.f32.xlu0 %v143
    %v145 = vpop.xlane.xlu0 %144
    %v146 = vrcp.pop 32.0
    %v147 = vmul.f32 32.0, %v146
    %v148 = vsub.f32 1.0, %v147
    %v149 = vmul.f32 %v146, %v148
    %v150 = vadd.f32 %v146, %v149
    %vm151 = vweird.f32 %v146
    %v152 = vsel %vm151, %v146, %v150
    %v153 = vmul.f32 %v145, %v152
    %v154 = vsub.f32 %v142, %v153
    %v155 = vmul.f32 %v154, %v154
    %v156 = vsel %vm118, %v155, 0.0
    %157 = vadd.xlane.f32.xlu0 %v156
    %v158 = vpop.xlane.xlu0 %157
    %v159 = vmul.f32 %v158, %v152
    %v160 = vadd.f32 %v159, 1e-05
    %v161 = vrsqrt.pop %v160
    %v162 = vmul.f32 %v161, %v160
    %v163 = vmul.f32 %v162, %v161
    %v164 = vmul.f32 0.5, %v163
    %v165 = vsub.f32 1.5, %v164
    %v166 = vmul.f32 %v161, %v165
    %vm167 = vweird.f32 %v160
    %vm168 = vweird.f32 %v161
    %vm169 = vmor %vm167, %vm168
    %v170 = vsel %vm169, %v161, %v166
    %v171 = vmul.f32 %v154, %v170
    %v172 = vperm.slane %v112, 1
    %v173 = vmul.f32 %v171, %v172
    %v174 = vperm.slane %v112, 2
    %v175 = vadd.f32 %v173, %v174
    %v176 = vld [vmem:[#allocation7] sm:$0xff]
    %v177 = vld [vmem:[#allocation7 + $0x8] sm:$0xff]
    %v178 = vld [vmem:[#allocation7 + $0x10] sm:$0xff]
    %v179 = vld [vmem:[#allocation7 + $0x18] sm:$0xff]
    %v180 = vld [vmem:[#allocation7 + $0x20] sm:$0xff]
    %v181 = vld [vmem:[#allocation7 + $0x28] sm:$0xff]
    %v182 = vld [vmem:[#allocation7 + $0x30] sm:$0xff]
    %v183 = vld [vmem:[#allocation7 + $0x38] sm:$0xff]
    %v184 = vld [vmem:[#allocation7 + $0x40] sm:$0xff]
    %v185 = vld [vmem:[#allocation7 + $0x48] sm:$0xff]
    %v186 = vld [vmem:[#allocation7 + $0x50] sm:$0xff]
    %v187 = vld [vmem:[#allocation7 + $0x58] sm:$0xff]
    %v188 = vld [vmem:[#allocation7 + $0x60] sm:$0xff]
    %v189 = vld [vmem:[#allocation7 + $0x68] sm:$0xff]
    %v190 = vld [vmem:[#allocation7 + $0x70] sm:$0xff]
    %v191 = vld [vmem:[#allocation7 + $0x78] sm:$0xff]
    %v192 = vld [vmem:[#allocation7 + $0x80] sm:$0xff]
    %v193 = vld [vmem:[#allocation7 + $0x88] sm:$0xff]
    %v194 = vld [vmem:[#allocation7 + $0x90] sm:$0xff]
    %v195 = vld [vmem:[#allocation7 + $0x98] sm:$0xff]
    %v196 = vld [vmem:[#allocation7 + $0xa0] sm:$0xff]
    %v197 = vld [vmem:[#allocation7 + $0xa8] sm:$0xff]
    %v198 = vld [vmem:[#allocation7 + $0xb0] sm:$0xff]
    %v199 = vld [vmem:[#allocation7 + $0xb8] sm:$0xff]
    %v200 = vld [vmem:[#allocation7 + $0xc0] sm:$0xff]
    %v201 = vld [vmem:[#allocation7 + $0xc8] sm:$0xff]
    %v202 = vld [vmem:[#allocation7 + $0xd0] sm:$0xff]
    %v203 = vld [vmem:[#allocation7 + $0xd8] sm:$0xff]
    %v204 = vld [vmem:[#allocation7 + $0xe0] sm:$0xff]
    %v205 = vld [vmem:[#allocation7 + $0xe8] sm:$0xff]
    %v206 = vld [vmem:[#allocation7 + $0xf0] sm:$0xff]
    %v207 = vld [vmem:[#allocation7 + $0xf8] sm:$0xff]
    %v208 = vld [vmem:[#allocation7 + $0x100] sm:$0xff]
    %v209 = vld [vmem:[#allocation7 + $0x108] sm:$0xff]
    %v210 = vld [vmem:[#allocation7 + $0x110] sm:$0xff]
    %v211 = vld [vmem:[#allocation7 + $0x118] sm:$0xff]
    %v212 = vld [vmem:[#allocation7 + $0x120] sm:$0xff]
    %v213 = vld [vmem:[#allocation7 + $0x128] sm:$0xff]
    %v214 = vld [vmem:[#allocation7 + $0x130] sm:$0xff]
    %v215 = vld [vmem:[#allocation7 + $0x138] sm:$0xff]
    %v216 = vld [vmem:[#allocation7 + $0x140] sm:$0xff]
    %v217 = vld [vmem:[#allocation7 + $0x148] sm:$0xff]
    %v218 = vld [vmem:[#allocation7 + $0x150] sm:$0xff]
    %v219 = vld [vmem:[#allocation7 + $0x158] sm:$0xff]
    %v220 = vld [vmem:[#allocation7 + $0x160] sm:$0xff]
    %v221 = vld [vmem:[#allocation7 + $0x168] sm:$0xff]
    %v222 = vld [vmem:[#allocation7 + $0x170] sm:$0xff]
    %v223 = vld [vmem:[#allocation7 + $0x178] sm:$0xff]
    %v224 = vld [vmem:[#allocation7 + $0x180] sm:$0xff]
    %v225 = vld [vmem:[#allocation7 + $0x188] sm:$0xff]
    %v226 = vld [vmem:[#allocation7 + $0x190] sm:$0xff]
    %v227 = vld [vmem:[#allocation7 + $0x198] sm:$0xff]
    %v228 = vld [vmem:[#allocation7 + $0x1a0] sm:$0xff]
    %v229 = vld [vmem:[#allocation7 + $0x1a8] sm:$0xff]
    %v230 = vld [vmem:[#allocation7 + $0x1b0] sm:$0xff]
    %v231 = vld [vmem:[#allocation7 + $0x1b8] sm:$0xff]
    %v232 = vld [vmem:[#allocation7 + $0x1c0] sm:$0xff]
    %v233 = vld [vmem:[#allocation7 + $0x1c8] sm:$0xff]
    %v234 = vld [vmem:[#allocation7 + $0x1d0] sm:$0xff]
    %v235 = vld [vmem:[#allocation7 + $0x1d8] sm:$0xff]
    %v236 = vld [vmem:[#allocation7 + $0x1e0] sm:$0xff]
    %v237 = vld [vmem:[#allocation7 + $0x1e8] sm:$0xff]
    %v238 = vld [vmem:[#allocation7 + $0x1f0] sm:$0xff]
    %v239 = vld [vmem:[#allocation7 + $0x1f8] sm:$0xff]
    %v240 = vld [vmem:[#allocation9] sm:$0xff]
    %v241 = vld [vmem:[#allocation9 + $0x8] sm:$0xff]
    %v244 = vperm.slane %v240, 0
    %v245 = vperm.slane %v240, 1
    %v246 = vperm.slane %v240, 2
    %v247 = vperm.slane %v240, 3
    %v248 = vperm.slane %v240, 4
    %v249 = vperm.slane %v240, 5
    %v250 = vperm.slane %v240, 6
    %v251 = vperm.slane %v240, 7
    %v252 = vperm.slane %v241, 0
    %v253 = vperm.slane %v241, 1
    %v254 = vperm.slane %v241, 2
    %v255 = vperm.slane %v241, 3
    %v256 = vperm.slane %v241, 4
    %v257 = vperm.slane %v241, 5
    %v258 = vperm.slane %v241, 6
    %v259 = vperm.slane %v241, 7
    %v277 = vsel %vm118, %v175, 0
    %279 = vmatpush.msra.mxu0 0.0
    %280 = vmatpush.msra.mxu0 0.0
    %281 = vmatpush.msra.mxu0 0.0
    %282 = vmatpush.msra.mxu0 0.0
    %283 = vmatpush.msra.mxu0 0.0
    %284 = vmatpush.msra.mxu0 0.0
    %285 = vmatpush.msra.mxu0 0.0
    %286 = vmatpush.msra.mxu0 0.0
    %287 = vmatpush.msra.mxu0 0.0
    %288 = vmatpush.msra.mxu0 0.0
    %289 = vmatpush.msra.mxu0 0.0
    %290 = vmatpush.msra.mxu0 0.0
    %291 = vmatpush.msra.mxu0 %v224
    %292 = vmatpush.msra.mxu0 %v208
    %293 = vmatpush.msra.mxu0 %v192
    %294 = vmatpush.msra.mxu0 %v176
    %295 = vmatmul.f32.gmra.mxu0 %v277
    %v296 = vpop.f32.mrf.mxu0
    %v297 = vadd.f32 %v244, %v296
    %298 = vdwg.mxu0
    %299 = vmatpush.msra.mxu0 0.0
    %300 = vmatpush.msra.mxu0 0.0
    %301 = vmatpush.msra.mxu0 0.0
    %302 = vmatpush.msra.mxu0 0.0
    %303 = vmatpush.msra.mxu0 0.0
    %304 = vmatpush.msra.mxu0 0.0
    %305 = vmatpush.msra.mxu0 0.0
    %306 = vmatpush.msra.mxu0 0.0
    %307 = vmatpush.msra.mxu0 0.0
    %308 = vmatpush.msra.mxu0 0.0
    %309 = vmatpush.msra.mxu0 0.0
    %310 = vmatpush.msra.mxu0 0.0
    %311 = vmatpush.msra.mxu0 %v225
    %312 = vmatpush.msra.mxu0 %v209
    %313 = vmatpush.msra.mxu0 %v193
    %314 = vmatpush.msra.mxu0 %v177
    %315 = vmatmul.f32.gmra.mxu0 %v277
    %v316 = vpop.f32.mrf.mxu0
    %v317 = vadd.f32 %v245, %v316
    %318 = vdwg.mxu0
    %319 = vmatpush.msra.mxu0 0.0
    %320 = vmatpush.msra.mxu0 0.0
    %321 = vmatpush.msra.mxu0 0.0
    %322 = vmatpush.msra.mxu0 0.0
    %323 = vmatpush.msra.mxu0 0.0
    %324 = vmatpush.msra.mxu0 0.0
    %325 = vmatpush.msra.mxu0 0.0
    %326 = vmatpush.msra.mxu0 0.0
    %327 = vmatpush.msra.mxu0 0.0
    %328 = vmatpush.msra.mxu0 0.0
    %329 = vmatpush.msra.mxu0 0.0
    %330 = vmatpush.msra.mxu0 0.0
    %331 = vmatpush.msra.mxu0 %v226
    %332 = vmatpush.msra.mxu0 %v210
    %333 = vmatpush.msra.mxu0 %v194
    %334 = vmatpush.msra.mxu0 %v178
    %335 = vmatmul.f32.gmra.mxu0 %v277
    %v336 = vpop.f32.mrf.mxu0
    %v337 = vadd.f32 %v246, %v336
    %338 = vdwg.mxu0
    %339 = vmatpush.msra.mxu0 0.0
    %340 = vmatpush.msra.mxu0 0.0
    %341 = vmatpush.msra.mxu0 0.0
    %342 = vmatpush.msra.mxu0 0.0
    %343 = vmatpush.msra.mxu0 0.0
    %344 = vmatpush.msra.mxu0 0.0
    %345 = vmatpush.msra.mxu0 0.0
    %346 = vmatpush.msra.mxu0 0.0
    %347 = vmatpush.msra.mxu0 0.0
    %348 = vmatpush.msra.mxu0 0.0
    %349 = vmatpush.msra.mxu0 0.0
    %350 = vmatpush.msra.mxu0 0.0
    %351 = vmatpush.msra.mxu0 %v227
    %352 = vmatpush.msra.mxu0 %v211
    %353 = vmatpush.msra.mxu0 %v195
    %354 = vmatpush.msra.mxu0 %v179
    %355 = vmatmul.f32.gmra.mxu0 %v277
    %v356 = vpop.f32.mrf.mxu0
    %v357 = vadd.f32 %v247, %v356
    %358 = vdwg.mxu0
    %359 = vmatpush.msra.mxu0 0.0
    %360 = vmatpush.msra.mxu0 0.0
    %361 = vmatpush.msra.mxu0 0.0
    %362 = vmatpush.msra.mxu0 0.0
    %363 = vmatpush.msra.mxu0 0.0
    %364 = vmatpush.msra.mxu0 0.0
    %365 = vmatpush.msra.mxu0 0.0
    %366 = vmatpush.msra.mxu0 0.0
    %367 = vmatpush.msra.mxu0 0.0
    %368 = vmatpush.msra.mxu0 0.0
    %369 = vmatpush.msra.mxu0 0.0
    %370 = vmatpush.msra.mxu0 0.0
    %371 = vmatpush.msra.mxu0 %v228
    %372 = vmatpush.msra.mxu0 %v212
    %373 = vmatpush.msra.mxu0 %v196
    %374 = vmatpush.msra.mxu0 %v180
    %375 = vmatmul.f32.gmra.mxu0 %v277
    %v376 = vpop.f32.mrf.mxu0
    %v377 = vadd.f32 %v248, %v376
    %378 = vdwg.mxu0
    %379 = vmatpush.msra.mxu0 0.0
    %380 = vmatpush.msra.mxu0 0.0
    %381 = vmatpush.msra.mxu0 0.0
    %382 = vmatpush.msra.mxu0 0.0
    %383 = vmatpush.msra.mxu0 0.0
    %384 = vmatpush.msra.mxu0 0.0
    %385 = vmatpush.msra.mxu0 0.0
    %386 = vmatpush.msra.mxu0 0.0
    %387 = vmatpush.msra.mxu0 0.0
    %388 = vmatpush.msra.mxu0 0.0
    %389 = vmatpush.msra.mxu0 0.0
    %390 = vmatpush.msra.mxu0 0.0
    %391 = vmatpush.msra.mxu0 %v229
    %392 = vmatpush.msra.mxu0 %v213
    %393 = vmatpush.msra.mxu0 %v197
    %394 = vmatpush.msra.mxu0 %v181
    %395 = vmatmul.f32.gmra.mxu0 %v277
    %v396 = vpop.f32.mrf.mxu0
    %v397 = vadd.f32 %v249, %v396
    %398 = vdwg.mxu0
    %399 = vmatpush.msra.mxu0 0.0
    %400 = vmatpush.msra.mxu0 0.0
    %401 = vmatpush.msra.mxu0 0.0
    %402 = vmatpush.msra.mxu0 0.0
    %403 = vmatpush.msra.mxu0 0.0
    %404 = vmatpush.msra.mxu0 0.0
    %405 = vmatpush.msra.mxu0 0.0
    %406 = vmatpush.msra.mxu0 0.0
    %407 = vmatpush.msra.mxu0 0.0
    %408 = vmatpush.msra.mxu0 0.0
    %409 = vmatpush.msra.mxu0 0.0
    %410 = vmatpush.msra.mxu0 0.0
    %411 = vmatpush.msra.mxu0 %v230
    %412 = vmatpush.msra.mxu0 %v214
    %413 = vmatpush.msra.mxu0 %v198
    %414 = vmatpush.msra.mxu0 %v182
    %415 = vmatmul.f32.gmra.mxu0 %v277
    %v416 = vpop.f32.mrf.mxu0
    %v417 = vadd.f32 %v250, %v416
    %418 = vdwg.mxu0
    %419 = vmatpush.msra.mxu0 0.0
    %420 = vmatpush.msra.mxu0 0.0
    %421 = vmatpush.msra.mxu0 0.0
    %422 = vmatpush.msra.mxu0 0.0
    %423 = vmatpush.msra.mxu0 0.0
    %424 = vmatpush.msra.mxu0 0.0
    %425 = vmatpush.msra.mxu0 0.0
    %426 = vmatpush.msra.mxu0 0.0
    %427 = vmatpush.msra.mxu0 0.0
    %428 = vmatpush.msra.mxu0 0.0
    %429 = vmatpush.msra.mxu0 0.0
    %430 = vmatpush.msra.mxu0 0.0
    %431 = vmatpush.msra.mxu0 %v231
    %432 = vmatpush.msra.mxu0 %v215
    %433 = vmatpush.msra.mxu0 %v199
    %434 = vmatpush.msra.mxu0 %v183
    %435 = vmatmul.f32.gmra.mxu0 %v277
    %v436 = vpop.f32.mrf.mxu0
    %v437 = vadd.f32 %v251, %v436
    %438 = vdwg.mxu0
    %439 = vmatpush.msra.mxu0 0.0
    %440 = vmatpush.msra.mxu0 0.0
    %441 = vmatpush.msra.mxu0 0.0
    %442 = vmatpush.msra.mxu0 0.0
    %443 = vmatpush.msra.mxu0 0.0
    %444 = vmatpush.msra.mxu0 0.0
    %445 = vmatpush.msra.mxu0 0.0
    %446 = vmatpush.msra.mxu0 0.0
    %447 = vmatpush.msra.mxu0 0.0
    %448 = vmatpush.msra.mxu0 0.0
    %449 = vmatpush.msra.mxu0 0.0
    %450 = vmatpush.msra.mxu0 0.0
    %451 = vmatpush.msra.mxu0 %v232
    %452 = vmatpush.msra.mxu0 %v216
    %453 = vmatpush.msra.mxu0 %v200
    %454 = vmatpush.msra.mxu0 %v184
    %455 = vmatmul.f32.gmra.mxu0 %v277
    %v456 = vpop.f32.mrf.mxu0
    %v457 = vadd.f32 %v252, %v456
    %458 = vdwg.mxu0
    %459 = vmatpush.msra.mxu0 0.0
    %460 = vmatpush.msra.mxu0 0.0
    %461 = vmatpush.msra.mxu0 0.0
    %462 = vmatpush.msra.mxu0 0.0
    %463 = vmatpush.msra.mxu0 0.0
    %464 = vmatpush.msra.mxu0 0.0
    %465 = vmatpush.msra.mxu0 0.0
    %466 = vmatpush.msra.mxu0 0.0
    %467 = vmatpush.msra.mxu0 0.0
    %468 = vmatpush.msra.mxu0 0.0
    %469 = vmatpush.msra.mxu0 0.0
    %470 = vmatpush.msra.mxu0 0.0
    %471 = vmatpush.msra.mxu0 %v233
    %472 = vmatpush.msra.mxu0 %v217
    %473 = vmatpush.msra.mxu0 %v201
    %474 = vmatpush.msra.mxu0 %v185
    %475 = vmatmul.f32.gmra.mxu0 %v277
    %v476 = vpop.f32.mrf.mxu0
    %v477 = vadd.f32 %v253, %v476
    %478 = vdwg.mxu0
    %479 = vmatpush.msra.mxu0 0.0
    %480 = vmatpush.msra.mxu0 0.0
    %481 = vmatpush.msra.mxu0 0.0
    %482 = vmatpush.msra.mxu0 0.0
    %483 = vmatpush.msra.mxu0 0.0
    %484 = vmatpush.msra.mxu0 0.0
    %485 = vmatpush.msra.mxu0 0.0
    %486 = vmatpush.msra.mxu0 0.0
    %487 = vmatpush.msra.mxu0 0.0
    %488 = vmatpush.msra.mxu0 0.0
    %489 = vmatpush.msra.mxu0 0.0
    %490 = vmatpush.msra.mxu0 0.0
    %491 = vmatpush.msra.mxu0 %v234
    %492 = vmatpush.msra.mxu0 %v218
    %493 = vmatpush.msra.mxu0 %v202
    %494 = vmatpush.msra.mxu0 %v186
    %495 = vmatmul.f32.gmra.mxu0 %v277
    %v496 = vpop.f32.mrf.mxu0
    %v497 = vadd.f32 %v254, %v496
    %498 = vdwg.mxu0
    %499 = vmatpush.msra.mxu0 0.0
    %500 = vmatpush.msra.mxu0 0.0
    %501 = vmatpush.msra.mxu0 0.0
    %502 = vmatpush.msra.mxu0 0.0
    %503 = vmatpush.msra.mxu0 0.0
    %504 = vmatpush.msra.mxu0 0.0
    %505 = vmatpush.msra.mxu0 0.0
    %506 = vmatpush.msra.mxu0 0.0
    %507 = vmatpush.msra.mxu0 0.0
    %508 = vmatpush.msra.mxu0 0.0
    %509 = vmatpush.msra.mxu0 0.0
    %510 = vmatpush.msra.mxu0 0.0
    %511 = vmatpush.msra.mxu0 %v235
    %512 = vmatpush.msra.mxu0 %v219
    %513 = vmatpush.msra.mxu0 %v203
    %514 = vmatpush.msra.mxu0 %v187
    %515 = vmatmul.f32.gmra.mxu0 %v277
    %v516 = vpop.f32.mrf.mxu0
    %v517 = vadd.f32 %v255, %v516
    %518 = vdwg.mxu0
    %519 = vmatpush.msra.mxu0 0.0
    %520 = vmatpush.msra.mxu0 0.0
    %521 = vmatpush.msra.mxu0 0.0
    %522 = vmatpush.msra.mxu0 0.0
    %523 = vmatpush.msra.mxu0 0.0
    %524 = vmatpush.msra.mxu0 0.0
    %525 = vmatpush.msra.mxu0 0.0
    %526 = vmatpush.msra.mxu0 0.0
    %527 = vmatpush.msra.mxu0 0.0
    %528 = vmatpush.msra.mxu0 0.0
    %529 = vmatpush.msra.mxu0 0.0
    %530 = vmatpush.msra.mxu0 0.0
    %531 = vmatpush.msra.mxu0 %v236
    %532 = vmatpush.msra.mxu0 %v220
    %533 = vmatpush.msra.mxu0 %v204
    %534 = vmatpush.msra.mxu0 %v188
    %535 = vmatmul.f32.gmra.mxu0 %v277
    %v536 = vpop.f32.mrf.mxu0
    %v537 = vadd.f32 %v256, %v536
    %538 = vdwg.mxu0
    %539 = vmatpush.msra.mxu0 0.0
    %540 = vmatpush.msra.mxu0 0.0
    %541 = vmatpush.msra.mxu0 0.0
    %542 = vmatpush.msra.mxu0 0.0
    %543 = vmatpush.msra.mxu0 0.0
    %544 = vmatpush.msra.mxu0 0.0
    %545 = vmatpush.msra.mxu0 0.0
    %546 = vmatpush.msra.mxu0 0.0
    %547 = vmatpush.msra.mxu0 0.0
    %548 = vmatpush.msra.mxu0 0.0
    %549 = vmatpush.msra.mxu0 0.0
    %550 = vmatpush.msra.mxu0 0.0
    %551 = vmatpush.msra.mxu0 %v237
    %552 = vmatpush.msra.mxu0 %v221
    %553 = vmatpush.msra.mxu0 %v205
    %554 = vmatpush.msra.mxu0 %v189
    %555 = vmatmul.f32.gmra.mxu0 %v277
    %v556 = vpop.f32.mrf.mxu0
    %v557 = vadd.f32 %v257, %v556
    %558 = vdwg.mxu0
    %559 = vmatpush.msra.mxu0 0.0
    %560 = vmatpush.msra.mxu0 0.0
    %561 = vmatpush.msra.mxu0 0.0
    %562 = vmatpush.msra.mxu0 0.0
    %563 = vmatpush.msra.mxu0 0.0
    %564 = vmatpush.msra.mxu0 0.0
    %565 = vmatpush.msra.mxu0 0.0
    %566 = vmatpush.msra.mxu0 0.0
    %567 = vmatpush.msra.mxu0 0.0
    %568 = vmatpush.msra.mxu0 0.0
    %569 = vmatpush.msra.mxu0 0.0
    %570 = vmatpush.msra.mxu0 0.0
    %571 = vmatpush.msra.mxu0 %v238
    %572 = vmatpush.msra.mxu0 %v222
    %573 = vmatpush.msra.mxu0 %v206
    %574 = vmatpush.msra.mxu0 %v190
    %575 = vmatmul.f32.gmra.mxu0 %v277
    %v576 = vpop.f32.mrf.mxu0
    %v577 = vadd.f32 %v258, %v576
    %578 = vdwg.mxu0
    %579 = vmatpush.msra.mxu0 0.0
    %580 = vmatpush.msra.mxu0 0.0
    %581 = vmatpush.msra.mxu0 0.0
    %582 = vmatpush.msra.mxu0 0.0
    %583 = vmatpush.msra.mxu0 0.0
    %584 = vmatpush.msra.mxu0 0.0
    %585 = vmatpush.msra.mxu0 0.0
    %586 = vmatpush.msra.mxu0 0.0
    %587 = vmatpush.msra.mxu0 0.0
    %588 = vmatpush.msra.mxu0 0.0
    %589 = vmatpush.msra.mxu0 0.0
    %590 = vmatpush.msra.mxu0 0.0
    %591 = vmatpush.msra.mxu0 %v239
    %592 = vmatpush.msra.mxu0 %v223
    %593 = vmatpush.msra.mxu0 %v207
    %594 = vmatpush.msra.mxu0 %v191
    %595 = vmatmul.f32.gmra.mxu0 %v277
    %v596 = vpop.f32.mrf.mxu0
    %v597 = vadd.f32 %v259, %v596
    %598 = vdwg.mxu0
    %v599 = vmax.f32 %v297, 0.0
    %v600 = vmax.f32 %v317, 0.0
    %v601 = vmax.f32 %v337, 0.0
    %v602 = vmax.f32 %v357, 0.0
    %v603 = vmax.f32 %v377, 0.0
    %v604 = vmax.f32 %v397, 0.0
    %v605 = vmax.f32 %v417, 0.0
    %v606 = vmax.f32 %v437, 0.0
    %v607 = vmax.f32 %v457, 0.0
    %v608 = vmax.f32 %v477, 0.0
    %v609 = vmax.f32 %v497, 0.0
    %v610 = vmax.f32 %v517, 0.0
    %v611 = vmax.f32 %v537, 0.0
    %v612 = vmax.f32 %v557, 0.0
    %v613 = vmax.f32 %v577, 0.0
    %v614 = vmax.f32 %v597, 0.0
    %v615 = vld [vmem:[#allocation10] sm:$0xff]
    %v616 = vld [vmem:[#allocation10 + $0x8] sm:$0xff]
    %v617 = vld [vmem:[#allocation10 + $0x10] sm:$0xff]
    %v618 = vld [vmem:[#allocation10 + $0x18] sm:$0xff]
    %v619 = vld [vmem:[#allocation10 + $0x20] sm:$0xff]
    %v620 = vld [vmem:[#allocation10 + $0x28] sm:$0xff]
    %v621 = vld [vmem:[#allocation10 + $0x30] sm:$0xff]
    %v622 = vld [vmem:[#allocation10 + $0x38] sm:$0xff]
    %v623 = vld [vmem:[#allocation10 + $0x40] sm:$0xff]
    %v624 = vld [vmem:[#allocation10 + $0x48] sm:$0xff]
    %v625 = vld [vmem:[#allocation10 + $0x50] sm:$0xff]
    %v626 = vld [vmem:[#allocation10 + $0x58] sm:$0xff]
    %v627 = vld [vmem:[#allocation10 + $0x60] sm:$0xff]
    %v628 = vld [vmem:[#allocation10 + $0x68] sm:$0xff]
    %v629 = vld [vmem:[#allocation10 + $0x70] sm:$0xff]
    %v630 = vld [vmem:[#allocation10 + $0x78] sm:$0xff]
    %v631 = vld [vmem:[#allocation10 + $0x80] sm:$0xff]
    %v632 = vld [vmem:[#allocation10 + $0x88] sm:$0xff]
    %v633 = vld [vmem:[#allocation10 + $0x90] sm:$0xff]
    %v634 = vld [vmem:[#allocation10 + $0x98] sm:$0xff]
    %v635 = vld [vmem:[#allocation10 + $0xa0] sm:$0xff]
    %v636 = vld [vmem:[#allocation10 + $0xa8] sm:$0xff]
    %v637 = vld [vmem:[#allocation10 + $0xb0] sm:$0xff]
    %v638 = vld [vmem:[#allocation10 + $0xb8] sm:$0xff]
    %v639 = vld [vmem:[#allocation10 + $0xc0] sm:$0xff]
    %v640 = vld [vmem:[#allocation10 + $0xc8] sm:$0xff]
    %v641 = vld [vmem:[#allocation10 + $0xd0] sm:$0xff]
    %v642 = vld [vmem:[#allocation10 + $0xd8] sm:$0xff]
    %v643 = vld [vmem:[#allocation10 + $0xe0] sm:$0xff]
    %v644 = vld [vmem:[#allocation10 + $0xe8] sm:$0xff]
    %v645 = vld [vmem:[#allocation10 + $0xf0] sm:$0xff]
    %v646 = vld [vmem:[#allocation10 + $0xf8] sm:$0xff]
    %v647 = vld [vmem:[#allocation10 + $0x100] sm:$0xff]
    %v648 = vld [vmem:[#allocation10 + $0x108] sm:$0xff]
    %v649 = vld [vmem:[#allocation10 + $0x110] sm:$0xff]
    %v650 = vld [vmem:[#allocation10 + $0x118] sm:$0xff]
    %v651 = vld [vmem:[#allocation10 + $0x120] sm:$0xff]
    %v652 = vld [vmem:[#allocation10 + $0x128] sm:$0xff]
    %v653 = vld [vmem:[#allocation10 + $0x130] sm:$0xff]
    %v654 = vld [vmem:[#allocation10 + $0x138] sm:$0xff]
    %v655 = vld [vmem:[#allocation10 + $0x140] sm:$0xff]
    %v656 = vld [vmem:[#allocation10 + $0x148] sm:$0xff]
    %v657 = vld [vmem:[#allocation10 + $0x150] sm:$0xff]
    %v658 = vld [vmem:[#allocation10 + $0x158] sm:$0xff]
    %v659 = vld [vmem:[#allocation10 + $0x160] sm:$0xff]
    %v660 = vld [vmem:[#allocation10 + $0x168] sm:$0xff]
    %v661 = vld [vmem:[#allocation10 + $0x170] sm:$0xff]
    %v662 = vld [vmem:[#allocation10 + $0x178] sm:$0xff]
    %v663 = vld [vmem:[#allocation10 + $0x180] sm:$0xff]
    %v664 = vld [vmem:[#allocation10 + $0x188] sm:$0xff]
    %v665 = vld [vmem:[#allocation10 + $0x190] sm:$0xff]
    %v666 = vld [vmem:[#allocation10 + $0x198] sm:$0xff]
    %v667 = vld [vmem:[#allocation10 + $0x1a0] sm:$0xff]
    %v668 = vld [vmem:[#allocation10 + $0x1a8] sm:$0xff]
    %v669 = vld [vmem:[#allocation10 + $0x1b0] sm:$0xff]
    %v670 = vld [vmem:[#allocation10 + $0x1b8] sm:$0xff]
    %v671 = vld [vmem:[#allocation10 + $0x1c0] sm:$0xff]
    %v672 = vld [vmem:[#allocation10 + $0x1c8] sm:$0xff]
    %v673 = vld [vmem:[#allocation10 + $0x1d0] sm:$0xff]
    %v674 = vld [vmem:[#allocation10 + $0x1d8] sm:$0xff]
    %v675 = vld [vmem:[#allocation10 + $0x1e0] sm:$0xff]
    %v676 = vld [vmem:[#allocation10 + $0x1e8] sm:$0xff]
    %v677 = vld [vmem:[#allocation10 + $0x1f0] sm:$0xff]
    %v678 = vld [vmem:[#allocation10 + $0x1f8] sm:$0xff]
    %v679 = vperm.slane %v112, 3
    %680 = vmatpush.xpose.msra.mxu0 0.0
    %681 = vmatpush.xpose.msra.mxu0 0.0
    %682 = vmatpush.xpose.msra.mxu0 0.0
    %683 = vmatpush.xpose.msra.mxu0 0.0
    %684 = vmatpush.xpose.msra.mxu0 0.0
    %685 = vmatpush.xpose.msra.mxu0 0.0
    %686 = vmatpush.xpose.msra.mxu0 0.0
    %687 = vmatpush.xpose.msra.mxu0 0.0
    %688 = vmatpush.xpose.msra.mxu0 0.0
    %689 = vmatpush.xpose.msra.mxu0 0.0
    %690 = vmatpush.xpose.msra.mxu0 0.0
    %691 = vmatpush.xpose.msra.mxu0 0.0
    %692 = vmatpush.xpose.msra.mxu0 %v663
    %693 = vmatpush.xpose.msra.mxu0 %v647
    %694 = vmatpush.xpose.msra.mxu0 %v631
    %695 = vmatpush.xpose.msra.mxu0 %v615
    %696 = vmatmul.f32.gmra.mxu0 %v599
    %v697 = vpop.f32.mrf.mxu0
    %v698 = vadd.f32 %v679, %v697
    %699 = vdwg.mxu0
    %700 = vmatpush.xpose.msra.mxu0 0.0
    %701 = vmatpush.xpose.msra.mxu0 0.0
    %702 = vmatpush.xpose.msra.mxu0 0.0
    %703 = vmatpush.xpose.msra.mxu0 0.0
    %704 = vmatpush.xpose.msra.mxu0 0.0
    %705 = vmatpush.xpose.msra.mxu0 0.0
    %706 = vmatpush.xpose.msra.mxu0 0.0
    %707 = vmatpush.xpose.msra.mxu0 0.0
    %708 = vmatpush.xpose.msra.mxu0 0.0
    %709 = vmatpush.xpose.msra.mxu0 0.0
    %710 = vmatpush.xpose.msra.mxu0 0.0
    %711 = vmatpush.xpose.msra.mxu0 0.0
    %712 = vmatpush.xpose.msra.mxu0 %v664
    %713 = vmatpush.xpose.msra.mxu0 %v648
    %714 = vmatpush.xpose.msra.mxu0 %v632
    %715 = vmatpush.xpose.msra.mxu0 %v616
    %716 = vmatmul.f32.gmra.mxu0 %v600
    %v717 = vpop.f32.mrf.mxu0
    %v718 = vadd.f32 %v698, %v717
    %719 = vdwg.mxu0
    %720 = vmatpush.xpose.msra.mxu0 0.0
    %721 = vmatpush.xpose.msra.mxu0 0.0
    %722 = vmatpush.xpose.msra.mxu0 0.0
    %723 = vmatpush.xpose.msra.mxu0 0.0
    %724 = vmatpush.xpose.msra.mxu0 0.0
    %725 = vmatpush.xpose.msra.mxu0 0.0
    %726 = vmatpush.xpose.msra.mxu0 0.0
    %727 = vmatpush.xpose.msra.mxu0 0.0
    %728 = vmatpush.xpose.msra.mxu0 0.0
    %729 = vmatpush.xpose.msra.mxu0 0.0
    %730 = vmatpush.xpose.msra.mxu0 0.0
    %731 = vmatpush.xpose.msra.mxu0 0.0
    %732 = vmatpush.xpose.msra.mxu0 %v665
    %733 = vmatpush.xpose.msra.mxu0 %v649
    %734 = vmatpush.xpose.msra.mxu0 %v633
    %735 = vmatpush.xpose.msra.mxu0 %v617
    %736 = vmatmul.f32.gmra.mxu0 %v601
    %v737 = vpop.f32.mrf.mxu0
    %v738 = vadd.f32 %v718, %v737
    %739 = vdwg.mxu0
    %740 = vmatpush.xpose.msra.mxu0 0.0
    %741 = vmatpush.xpose.msra.mxu0 0.0
    %742 = vmatpush.xpose.msra.mxu0 0.0
    %743 = vmatpush.xpose.msra.mxu0 0.0
    %744 = vmatpush.xpose.msra.mxu0 0.0
    %745 = vmatpush.xpose.msra.mxu0 0.0
    %746 = vmatpush.xpose.msra.mxu0 0.0
    %747 = vmatpush.xpose.msra.mxu0 0.0
    %748 = vmatpush.xpose.msra.mxu0 0.0
    %749 = vmatpush.xpose.msra.mxu0 0.0
    %750 = vmatpush.xpose.msra.mxu0 0.0
    %751 = vmatpush.xpose.msra.mxu0 0.0
    %752 = vmatpush.xpose.msra.mxu0 %v666
    %753 = vmatpush.xpose.msra.mxu0 %v650
    %754 = vmatpush.xpose.msra.mxu0 %v634
    %755 = vmatpush.xpose.msra.mxu0 %v618
    %756 = vmatmul.f32.gmra.mxu0 %v602
    %v757 = vpop.f32.mrf.mxu0
    %v758 = vadd.f32 %v738, %v757
    %759 = vdwg.mxu0
    %760 = vmatpush.xpose.msra.mxu0 0.0
    %761 = vmatpush.xpose.msra.mxu0 0.0
    %762 = vmatpush.xpose.msra.mxu0 0.0
    %763 = vmatpush.xpose.msra.mxu0 0.0
    %764 = vmatpush.xpose.msra.mxu0 0.0
    %765 = vmatpush.xpose.msra.mxu0 0.0
    %766 = vmatpush.xpose.msra.mxu0 0.0
    %767 = vmatpush.xpose.msra.mxu0 0.0
    %768 = vmatpush.xpose.msra.mxu0 0.0
    %769 = vmatpush.xpose.msra.mxu0 0.0
    %770 = vmatpush.xpose.msra.mxu0 0.0
    %771 = vmatpush.xpose.msra.mxu0 0.0
    %772 = vmatpush.xpose.msra.mxu0 %v667
    %773 = vmatpush.xpose.msra.mxu0 %v651
    %774 = vmatpush.xpose.msra.mxu0 %v635
    %775 = vmatpush.xpose.msra.mxu0 %v619
    %776 = vmatmul.f32.gmra.mxu0 %v603
    %v777 = vpop.f32.mrf.mxu0
    %v778 = vadd.f32 %v758, %v777
    %779 = vdwg.mxu0
    %780 = vmatpush.xpose.msra.mxu0 0.0
    %781 = vmatpush.xpose.msra.mxu0 0.0
    %782 = vmatpush.xpose.msra.mxu0 0.0
    %783 = vmatpush.xpose.msra.mxu0 0.0
    %784 = vmatpush.xpose.msra.mxu0 0.0
    %785 = vmatpush.xpose.msra.mxu0 0.0
    %786 = vmatpush.xpose.msra.mxu0 0.0
    %787 = vmatpush.xpose.msra.mxu0 0.0
    %788 = vmatpush.xpose.msra.mxu0 0.0
    %789 = vmatpush.xpose.msra.mxu0 0.0
    %790 = vmatpush.xpose.msra.mxu0 0.0
    %791 = vmatpush.xpose.msra.mxu0 0.0
    %792 = vmatpush.xpose.msra.mxu0 %v668
    %793 = vmatpush.xpose.msra.mxu0 %v652
    %794 = vmatpush.xpose.msra.mxu0 %v636
    %795 = vmatpush.xpose.msra.mxu0 %v620
    %796 = vmatmul.f32.gmra.mxu0 %v604
    %v797 = vpop.f32.mrf.mxu0
    %v798 = vadd.f32 %v778, %v797
    %799 = vdwg.mxu0
    %800 = vmatpush.xpose.msra.mxu0 0.0
    %801 = vmatpush.xpose.msra.mxu0 0.0
    %802 = vmatpush.xpose.msra.mxu0 0.0
    %803 = vmatpush.xpose.msra.mxu0 0.0
    %804 = vmatpush.xpose.msra.mxu0 0.0
    %805 = vmatpush.xpose.msra.mxu0 0.0
    %806 = vmatpush.xpose.msra.mxu0 0.0
    %807 = vmatpush.xpose.msra.mxu0 0.0
    %808 = vmatpush.xpose.msra.mxu0 0.0
    %809 = vmatpush.xpose.msra.mxu0 0.0
    %810 = vmatpush.xpose.msra.mxu0 0.0
    %811 = vmatpush.xpose.msra.mxu0 0.0
    %812 = vmatpush.xpose.msra.mxu0 %v669
    %813 = vmatpush.xpose.msra.mxu0 %v653
    %814 = vmatpush.xpose.msra.mxu0 %v637
    %815 = vmatpush.xpose.msra.mxu0 %v621
    %816 = vmatmul.f32.gmra.mxu0 %v605
    %v817 = vpop.f32.mrf.mxu0
    %v818 = vadd.f32 %v798, %v817
    %819 = vdwg.mxu0
    %820 = vmatpush.xpose.msra.mxu0 0.0
    %821 = vmatpush.xpose.msra.mxu0 0.0
    %822 = vmatpush.xpose.msra.mxu0 0.0
    %823 = vmatpush.xpose.msra.mxu0 0.0
    %824 = vmatpush.xpose.msra.mxu0 0.0
    %825 = vmatpush.xpose.msra.mxu0 0.0
    %826 = vmatpush.xpose.msra.mxu0 0.0
    %827 = vmatpush.xpose.msra.mxu0 0.0
    %828 = vmatpush.xpose.msra.mxu0 0.0
    %829 = vmatpush.xpose.msra.mxu0 0.0
    %830 = vmatpush.xpose.msra.mxu0 0.0
    %831 = vmatpush.xpose.msra.mxu0 0.0
    %832 = vmatpush.xpose.msra.mxu0 %v670
    %833 = vmatpush.xpose.msra.mxu0 %v654
    %834 = vmatpush.xpose.msra.mxu0 %v638
    %835 = vmatpush.xpose.msra.mxu0 %v622
    %836 = vmatmul.f32.gmra.mxu0 %v606
    %v837 = vpop.f32.mrf.mxu0
    %v838 = vadd.f32 %v818, %v837
    %839 = vdwg.mxu0
    %840 = vmatpush.xpose.msra.mxu0 0.0
    %841 = vmatpush.xpose.msra.mxu0 0.0
    %842 = vmatpush.xpose.msra.mxu0 0.0
    %843 = vmatpush.xpose.msra.mxu0 0.0
    %844 = vmatpush.xpose.msra.mxu0 0.0
    %845 = vmatpush.xpose.msra.mxu0 0.0
    %846 = vmatpush.xpose.msra.mxu0 0.0
    %847 = vmatpush.xpose.msra.mxu0 0.0
    %848 = vmatpush.xpose.msra.mxu0 0.0
    %849 = vmatpush.xpose.msra.mxu0 0.0
    %850 = vmatpush.xpose.msra.mxu0 0.0
    %851 = vmatpush.xpose.msra.mxu0 0.0
    %852 = vmatpush.xpose.msra.mxu0 %v671
    %853 = vmatpush.xpose.msra.mxu0 %v655
    %854 = vmatpush.xpose.msra.mxu0 %v639
    %855 = vmatpush.xpose.msra.mxu0 %v623
    %856 = vmatmul.f32.gmra.mxu0 %v607
    %v857 = vpop.f32.mrf.mxu0
    %v858 = vadd.f32 %v838, %v857
    %859 = vdwg.mxu0
    %860 = vmatpush.xpose.msra.mxu0 0.0
    %861 = vmatpush.xpose.msra.mxu0 0.0
    %862 = vmatpush.xpose.msra.mxu0 0.0
    %863 = vmatpush.xpose.msra.mxu0 0.0
    %864 = vmatpush.xpose.msra.mxu0 0.0
    %865 = vmatpush.xpose.msra.mxu0 0.0
    %866 = vmatpush.xpose.msra.mxu0 0.0
    %867 = vmatpush.xpose.msra.mxu0 0.0
    %868 = vmatpush.xpose.msra.mxu0 0.0
    %869 = vmatpush.xpose.msra.mxu0 0.0
    %870 = vmatpush.xpose.msra.mxu0 0.0
    %871 = vmatpush.xpose.msra.mxu0 0.0
    %872 = vmatpush.xpose.msra.mxu0 %v672
    %873 = vmatpush.xpose.msra.mxu0 %v656
    %874 = vmatpush.xpose.msra.mxu0 %v640
    %875 = vmatpush.xpose.msra.mxu0 %v624
    %876 = vmatmul.f32.gmra.mxu0 %v608
    %v877 = vpop.f32.mrf.mxu0
    %v878 = vadd.f32 %v858, %v877
    %879 = vdwg.mxu0
    %880 = vmatpush.xpose.msra.mxu0 0.0
    %881 = vmatpush.xpose.msra.mxu0 0.0
    %882 = vmatpush.xpose.msra.mxu0 0.0
    %883 = vmatpush.xpose.msra.mxu0 0.0
    %884 = vmatpush.xpose.msra.mxu0 0.0
    %885 = vmatpush.xpose.msra.mxu0 0.0
    %886 = vmatpush.xpose.msra.mxu0 0.0
    %887 = vmatpush.xpose.msra.mxu0 0.0
    %888 = vmatpush.xpose.msra.mxu0 0.0
    %889 = vmatpush.xpose.msra.mxu0 0.0
    %890 = vmatpush.xpose.msra.mxu0 0.0
    %891 = vmatpush.xpose.msra.mxu0 0.0
    %892 = vmatpush.xpose.msra.mxu0 %v673
    %893 = vmatpush.xpose.msra.mxu0 %v657
    %894 = vmatpush.xpose.msra.mxu0 %v641
    %895 = vmatpush.xpose.msra.mxu0 %v625
    %896 = vmatmul.f32.gmra.mxu0 %v609
    %v897 = vpop.f32.mrf.mxu0
    %v898 = vadd.f32 %v878, %v897
    %899 = vdwg.mxu0
    %900 = vmatpush.xpose.msra.mxu0 0.0
    %901 = vmatpush.xpose.msra.mxu0 0.0
    %902 = vmatpush.xpose.msra.mxu0 0.0
    %903 = vmatpush.xpose.msra.mxu0 0.0
    %904 = vmatpush.xpose.msra.mxu0 0.0
    %905 = vmatpush.xpose.msra.mxu0 0.0
    %906 = vmatpush.xpose.msra.mxu0 0.0
    %907 = vmatpush.xpose.msra.mxu0 0.0
    %908 = vmatpush.xpose.msra.mxu0 0.0
    %909 = vmatpush.xpose.msra.mxu0 0.0
    %910 = vmatpush.xpose.msra.mxu0 0.0
    %911 = vmatpush.xpose.msra.mxu0 0.0
    %912 = vmatpush.xpose.msra.mxu0 %v674
    %913 = vmatpush.xpose.msra.mxu0 %v658
    %914 = vmatpush.xpose.msra.mxu0 %v642
    %915 = vmatpush.xpose.msra.mxu0 %v626
    %916 = vmatmul.f32.gmra.mxu0 %v610
    %v917 = vpop.f32.mrf.mxu0
    %v918 = vadd.f32 %v898, %v917
    %919 = vdwg.mxu0
    %920 = vmatpush.xpose.msra.mxu0 0.0
    %921 = vmatpush.xpose.msra.mxu0 0.0
    %922 = vmatpush.xpose.msra.mxu0 0.0
    %923 = vmatpush.xpose.msra.mxu0 0.0
    %924 = vmatpush.xpose.msra.mxu0 0.0
    %925 = vmatpush.xpose.msra.mxu0 0.0
    %926 = vmatpush.xpose.msra.mxu0 0.0
    %927 = vmatpush.xpose.msra.mxu0 0.0
    %928 = vmatpush.xpose.msra.mxu0 0.0
    %929 = vmatpush.xpose.msra.mxu0 0.0
    %930 = vmatpush.xpose.msra.mxu0 0.0
    %931 = vmatpush.xpose.msra.mxu0 0.0
    %932 = vmatpush.xpose.msra.mxu0 %v675
    %933 = vmatpush.xpose.msra.mxu0 %v659
    %934 = vmatpush.xpose.msra.mxu0 %v643
    %935 = vmatpush.xpose.msra.mxu0 %v627
    %936 = vmatmul.f32.gmra.mxu0 %v611
    %v937 = vpop.f32.mrf.mxu0
    %v938 = vadd.f32 %v918, %v937
    %939 = vdwg.mxu0
    %940 = vmatpush.xpose.msra.mxu0 0.0
    %941 = vmatpush.xpose.msra.mxu0 0.0
    %942 = vmatpush.xpose.msra.mxu0 0.0
    %943 = vmatpush.xpose.msra.mxu0 0.0
    %944 = vmatpush.xpose.msra.mxu0 0.0
    %945 = vmatpush.xpose.msra.mxu0 0.0
    %946 = vmatpush.xpose.msra.mxu0 0.0
    %947 = vmatpush.xpose.msra.mxu0 0.0
    %948 = vmatpush.xpose.msra.mxu0 0.0
    %949 = vmatpush.xpose.msra.mxu0 0.0
    %950 = vmatpush.xpose.msra.mxu0 0.0
    %951 = vmatpush.xpose.msra.mxu0 0.0
    %952 = vmatpush.xpose.msra.mxu0 %v676
    %953 = vmatpush.xpose.msra.mxu0 %v660
    %954 = vmatpush.xpose.msra.mxu0 %v644
    %955 = vmatpush.xpose.msra.mxu0 %v628
    %956 = vmatmul.f32.gmra.mxu0 %v612
    %v957 = vpop.f32.mrf.mxu0
    %v958 = vadd.f32 %v938, %v957
    %959 = vdwg.mxu0
    %960 = vmatpush.xpose.msra.mxu0 0.0
    %961 = vmatpush.xpose.msra.mxu0 0.0
    %962 = vmatpush.xpose.msra.mxu0 0.0
    %963 = vmatpush.xpose.msra.mxu0 0.0
    %964 = vmatpush.xpose.msra.mxu0 0.0
    %965 = vmatpush.xpose.msra.mxu0 0.0
    %966 = vmatpush.xpose.msra.mxu0 0.0
    %967 = vmatpush.xpose.msra.mxu0 0.0
    %968 = vmatpush.xpose.msra.mxu0 0.0
    %969 = vmatpush.xpose.msra.mxu0 0.0
    %970 = vmatpush.xpose.msra.mxu0 0.0
    %971 = vmatpush.xpose.msra.mxu0 0.0
    %972 = vmatpush.xpose.msra.mxu0 %v677
    %973 = vmatpush.xpose.msra.mxu0 %v661
    %974 = vmatpush.xpose.msra.mxu0 %v645
    %975 = vmatpush.xpose.msra.mxu0 %v629
    %976 = vmatmul.f32.gmra.mxu0 %v613
    %v977 = vpop.f32.mrf.mxu0
    %v978 = vadd.f32 %v958, %v977
    %979 = vdwg.mxu0
    %980 = vmatpush.xpose.msra.mxu0 0.0
    %981 = vmatpush.xpose.msra.mxu0 0.0
    %982 = vmatpush.xpose.msra.mxu0 0.0
    %983 = vmatpush.xpose.msra.mxu0 0.0
    %984 = vmatpush.xpose.msra.mxu0 0.0
    %985 = vmatpush.xpose.msra.mxu0 0.0
    %986 = vmatpush.xpose.msra.mxu0 0.0
    %987 = vmatpush.xpose.msra.mxu0 0.0
    %988 = vmatpush.xpose.msra.mxu0 0.0
    %989 = vmatpush.xpose.msra.mxu0 0.0
    %990 = vmatpush.xpose.msra.mxu0 0.0
    %991 = vmatpush.xpose.msra.mxu0 0.0
    %992 = vmatpush.xpose.msra.mxu0 %v678
    %993 = vmatpush.xpose.msra.mxu0 %v662
    %994 = vmatpush.xpose.msra.mxu0 %v646
    %995 = vmatpush.xpose.msra.mxu0 %v630
    %996 = vmatmul.f32.gmra.mxu0 %v614
    %v997 = vpop.f32.mrf.mxu0
    %v998 = vadd.f32 %v978, %v997
    %999 = vdwg.mxu0
    %v1000 = vadd.f32 %v175, %v998
    %v1001 = vsel %vm118, %v1000, 0.0
    %1002 = vadd.xlane.f32.xlu0 %v1001
    %v1003 = vpop.xlane.xlu0 %1002
    %v1004 = vmul.f32 %v1003, %v152
    %v1005 = vsub.f32 %v1000, %v1004
    %v1006 = vmul.f32 %v1005, %v1005
    %v1007 = vsel %vm118, %v1006, 0.0
    %1008 = vadd.xlane.f32.xlu0 %v1007
    %v1009 = vpop.xlane.xlu0 %1008
    %v1010 = vmul.f32 %v1009, %v152
    %v1011 = vadd.f32 %v1010, 1e-05
    %v1012 = vrsqrt.pop %v1011
    %v1013 = vmul.f32 %v1012, %v1011
    %v1014 = vmul.f32 %v1013, %v1012
    %v1015 = vmul.f32 0.5, %v1014
    %v1016 = vsub.f32 1.5, %v1015
    %v1017 = vmul.f32 %v1012, %v1016
    %vm1018 = vweird.f32 %v1011
    %vm1019 = vweird.f32 %v1012
    %vm1020 = vmor %vm1018, %vm1019
    %v1021 = vsel %vm1020, %v1012, %v1017
    %v1022 = vmul.f32 %v1005, %v1021
    %v1023 = vperm.slane %v112, 4
    %v1024 = vmul.f32 %v1022, %v1023
    %v1025 = vperm.slane %v112, 5
    %v1026 = vadd.f32 %v1024, %v1025
    %v1027 = vperm.slane %v112, 6
    %v1028 = vmul.f32 %v1026, %v1027
    %v1029 = vsel %vm118, %v1028, 0.0
    %1030 = vadd.xlane.f32.xlu0 %v1029
    %v1031 = vpop.xlane.xlu0 %1030
    %v1032 = vperm.slane %v112, 7
    %v1033 = vadd.f32 %v1031, %v1032
    %vm1034 = vcmask 7168
    %1035 = vst.msk [vmem:[%s6] sm:$0xff] %vm1034, %v1033
    // Predicated region
    $region50: #{tpu_custom_call.1} parent=1 // pred_check
      _
    $region51: #{tpu_custom_call.1} parent=1 // pred_check_branch
      %1037 = sbr.rel (0) target = $region53
    $region52: #{tpu_custom_call.1} parent=1 // pred_region
      _
    $region53: #{tpu_custom_call.1} parent=1 // pred_fallthru
      _
    // Predicated region
    $region54: #{tpu_custom_call.1} parent=1 // pred_check
      _
    $region55: #{tpu_custom_call.1} parent=1 // pred_check_branch
      %1039 = sbr.rel (0) target = $region57
    $region56: #{tpu_custom_call.1} parent=1 // pred_region
      _
    $region57: #{tpu_custom_call.1} parent=1 // pred_fallthru
      _
    %1040 = vsyncpa [#allocation3], 1
    %1041 = vsyncpa [#allocation5], 1
    %1042 = vsyncpa [#allocation8], 1
    %1043 = vsyncpa [#allocation11], 1

</llo_original>
